<compile_context>
chip_gen: v6e
topology: v6e:2x2x1
jax: 0.10.0
libtpu: 0.0.40
codegen_flags: <defaults>
</compile_context>

<pallas_src>
import functools

import jax
import jax.numpy as jnp
from jax.experimental import pallas as pl
from jax.experimental.pallas import tpu as pltpu

_LANE = 128
_SUB = 8
_MAX_BLOCK_ROWS = 1024      # 1024x128 f32 block = 512 KiB; 2 streams x 2 bufs = 2 MiB VMEM
_NUM_PARALLEL = 2           # leading 'parallel' grid axis (megacore on v7x)
_PAD_SENTINEL = -1.0e30     # negative -> m = 0; |x - t| huge -> d = 0; finite -> no NaN


def _soft_iou_partial_kernel(x_ref, t_ref, max_ref, d_ref, m_ref, dm_ref, *, eps):
    """Accumulates per-core partials of max(t), sum(d), sum(m), sum(d*m).

    Grid is (P, inner): the leading 'parallel' axis splits the row range across
    TensorCores; the inner 'arbitrary' axis walks (block_rows, 128) tiles. The
    four outputs are (8,128) vreg-sized accumulators per core (P3 pattern):
    init at inner step 0, folded with sublane-grouped VPU reductions per step.
    """
    i = pl.program_id(1)

    @pl.when(i == 0)
    def _init():
        max_ref[...] = jnp.full(max_ref.shape, -jnp.inf, max_ref.dtype)
        d_ref[...] = jnp.zeros(d_ref.shape, d_ref.dtype)
        m_ref[...] = jnp.zeros(m_ref.shape, m_ref.dtype)
        dm_ref[...] = jnp.zeros(dm_ref.shape, dm_ref.dtype)

    x = x_ref[...]            # (block_rows, 128) f32
    t = t_ref[...]            # (block_rows, 128) f32

    # invsigm_distance = sigmoid(-|x - t| + eps); zero at padding because the
    # sentinel makes |x - t| huge.
    d = jax.nn.sigmoid(eps - jnp.abs(x - t))
    # m_i = 1 iff t_i is a non-negative integer value (belongs to exactly one
    # class c in [0, n_classes]); zero at padding because sentinel < 0.
    m = jnp.where((t == jnp.floor(t)) & (t >= 0.0), 1.0, 0.0).astype(jnp.float32)
    dm = d * m

    # Fold the block into one-vreg accumulators with sublane-aligned reductions
    # (leading-dim VPU adds); no per-step cross-lane work.
    k = x_ref.shape[0] // _SUB
    t3 = t.reshape(k, _SUB, _LANE)
    d3 = d.reshape(k, _SUB, _LANE)
    m3 = m.reshape(k, _SUB, _LANE)
    dm3 = dm.reshape(k, _SUB, _LANE)

    max_ref[...] = jnp.maximum(max_ref[...], jnp.max(t3, axis=0))
    d_ref[...] = d_ref[...] + jnp.sum(d3, axis=0)
    m_ref[...] = m_ref[...] + jnp.sum(m3, axis=0)
    dm_ref[...] = dm_ref[...] + jnp.sum(dm3, axis=0)


def soft_iou_loss(inputs, targets, eps=0.5, smooth=1.0):
    """Pallas implementation of softIoULoss.forward(inputs, targets, smooth)."""
    x = inputs.reshape(-1).astype(jnp.float32)
    t = targets.reshape(-1).astype(jnp.float32)
    n = x.shape[0]

    # Static tiling math (Python ints). Shrink the block for tiny inputs so the
    # padding stays negligible; cap it at _MAX_BLOCK_ROWS for big ones.
    rows_needed = -(-n // _LANE)
    rows_per_core = -(-rows_needed // _NUM_PARALLEL)
    block_rows = min(_MAX_BLOCK_ROWS, _SUB * (-(-rows_per_core // _SUB)))
    inner = -(-rows_per_core // block_rows)
    total_rows = _NUM_PARALLEL * inner * block_rows
    pad = total_rows * _LANE - n

    # Single fused pad + reshape per tensor; no mask stream.
    x2 = jnp.pad(x, (0, pad)).reshape(total_rows, _LANE)
    t2 = jnp.pad(t, (0, pad), constant_values=_PAD_SENTINEL).reshape(total_rows, _LANE)

    in_spec = pl.BlockSpec((block_rows, _LANE),
                           lambda p, i, _inner=inner: (p * _inner + i, 0))
    acc_spec = pl.BlockSpec((None, _SUB, _LANE), lambda p, i: (p, 0, 0))
    acc_shape = jax.ShapeDtypeStruct((_NUM_PARALLEL, _SUB, _LANE), jnp.float32)

    total_elems = total_rows * _LANE
    cost = pl.CostEstimate(
        flops=10 * total_elems,
        transcendentals=total_elems,        # one sigmoid per element
        bytes_accessed=2 * total_elems * 4,  # x + t streams (f32)
    )

    part_max, part_d, part_m, part_dm = pl.pallas_call(
        functools.partial(_soft_iou_partial_kernel, eps=float(eps)),
        out_shape=(acc_shape, acc_shape, acc_shape, acc_shape),
        grid_spec=pltpu.PrefetchScalarGridSpec(
            num_scalar_prefetch=0,
            grid=(_NUM_PARALLEL, inner),
            in_specs=[in_spec, in_spec],
            out_specs=[acc_spec, acc_spec, acc_spec, acc_spec],
        ),
        compiler_params=pltpu.CompilerParams(
            dimension_semantics=("parallel", "arbitrary")),
        cost_estimate=cost,
    )(x2, t2)

    # Tiny final cross-lane/core reductions in plain JAX.
    t_max = jnp.max(part_max)
    s_d = jnp.sum(part_d)
    s_m = jnp.sum(part_m)
    s_dm = jnp.sum(part_dm)

    # n_classes = targets.max().int() (truncation toward zero). Clamp to -1 so
    # a degenerate all-negative / all-padding max never hits trunc(-inf); for
    # any t_max <= -1 the original class loop is empty and the loss is 0.
    n_classes_f = jnp.trunc(jnp.maximum(t_max, -1.0))
    num_classes = n_classes_f + 1.0

    intersection = s_dm
    union = s_m + num_classes * s_d - s_dm
    loss = 1.0 - (intersection + smooth) / (union + smooth)
    loss = jnp.where(num_classes <= 0.0, jnp.zeros_like(loss), loss)
    return loss


def _reference_soft_iou_loss(inputs, targets, eps=0.5, smooth=1.0):
    """Plain-numpy replica of the original per-class PyTorch loop (for checking)."""
    import numpy as np
    x = np.asarray(inputs, dtype=np.float32).reshape(-1)
    t = np.asarray(targets, dtype=np.float32).reshape(-1)
    n_classes = int(np.trunc(t.max()))
    intersection, union = 0.0, 0.0
    for c in range(0, n_classes + 1):
        class_mask = np.where(t == c, 1.0, 0.0).astype(np.float32)
        d = 1.0 / (1.0 + np.exp(-(-np.abs(x - t) + eps)))
        tmp = d * class_mask
        intersection += tmp.sum()
        union += (class_mask + d - tmp).sum()
    return 1.0 - (intersection + smooth) / (union + smooth)


if __name__ == "__main__":
    key = jax.random.PRNGKey(0)
    k1, k2 = jax.random.split(key)

    # NCHW: batch=2, channels=4, spatial=16x16
    inputs = jax.random.normal(k1, (2, 4, 16, 16), dtype=jnp.float32) + 1.5
    targets = jax.random.randint(k2, (2, 4, 16, 16), 0, 4).astype(jnp.float32)

    loss = soft_iou_loss(inputs, targets)
    loss = jax.block_until_ready(loss)

    ref = _reference_soft_iou_loss(jax.device_get(inputs), jax.device_get(targets))
    assert abs(float(loss) - float(ref)) < 1e-4, (float(loss), float(ref))

    print("KERNEL_OK")
</pallas_src>

<mosaic_0001>
module attributes {stable_mosaic.version = 11 : i64} {
  func.func @_soft_iou_partial_kernel(%arg0: i32, %arg1: i32, %arg2: memref<8x128xf32, #tpu.memory_space<vmem>>, %arg3: memref<8x128xf32, #tpu.memory_space<vmem>>, %arg4: memref<1x8x128xf32, #tpu.memory_space<vmem>>, %arg5: memref<1x8x128xf32, #tpu.memory_space<vmem>>, %arg6: memref<1x8x128xf32, #tpu.memory_space<vmem>>, %arg7: memref<1x8x128xf32, #tpu.memory_space<vmem>>) attributes {dimension_semantics = [#tpu.dimension_semantics<parallel>, #tpu.dimension_semantics<arbitrary>], iteration_bounds = array<i64: 2, 1>, scalar_prefetch = 0 : i64, scratch_operands = 0 : i64, tpu.core_type = #tpu.core_type<tc>, window_params = [{transform_indices = @transform_0, window_bounds = array<i64: 8, 128>}, {transform_indices = @transform_1, window_bounds = array<i64: 8, 128>}, {transform_indices = @transform_2, window_bounds = array<i64: 1, 8, 128>}, {transform_indices = @transform_3, window_bounds = array<i64: 1, 8, 128>}, {transform_indices = @transform_4, window_bounds = array<i64: 1, 8, 128>}, {transform_indices = @transform_5, window_bounds = array<i64: 1, 8, 128>}]} {
    %c0_i32 = arith.constant 0 : i32
    %0 = arith.cmpi eq, %arg1, %c0_i32 : i32
    %1 = arith.extui %0 : i1 to i32
    %c0_i32_0 = arith.constant 0 : i32
    %2 = arith.cmpi ne, %1, %c0_i32_0 : i32
    scf.if %2 {
      %cst_36 = arith.constant 0xFF800000 : f32
      %55 = vector.broadcast %cst_36 : f32 to vector<8x128xf32>
      %c0_37 = arith.constant 0 : index
      %c0_38 = arith.constant 0 : index
      %c0_39 = arith.constant 0 : index
      %56 = vector.load %arg4[%c0_37, %c0_38, %c0_39] : memref<1x8x128xf32, #tpu.memory_space<vmem>>, vector<1x8x128xf32>
      %57 = vector.shape_cast %56 : vector<1x8x128xf32> to vector<8x128xf32>
      %58 = vector.shape_cast %55 : vector<8x128xf32> to vector<1x8x128xf32>
      tpu.vector_store %arg4[%c0_37, %c0_38, %c0_39], %58 {strides = array<i32>} : memref<1x8x128xf32, #tpu.memory_space<vmem>>, vector<1x8x128xf32>,
      %cst_40 = arith.constant 0.000000e+00 : f32
      %59 = vector.broadcast %cst_40 : f32 to vector<8x128xf32>
      %c0_41 = arith.constant 0 : index
      %c0_42 = arith.constant 0 : index
      %c0_43 = arith.constant 0 : index
      %60 = vector.load %arg5[%c0_41, %c0_42, %c0_43] : memref<1x8x128xf32, #tpu.memory_space<vmem>>, vector<1x8x128xf32>
      %61 = vector.shape_cast %60 : vector<1x8x128xf32> to vector<8x128xf32>
      %62 = vector.shape_cast %59 : vector<8x128xf32> to vector<1x8x128xf32>
      tpu.vector_store %arg5[%c0_41, %c0_42, %c0_43], %62 {strides = array<i32>} : memref<1x8x128xf32, #tpu.memory_space<vmem>>, vector<1x8x128xf32>,
      %cst_44 = arith.constant 0.000000e+00 : f32
      %63 = vector.broadcast %cst_44 : f32 to vector<8x128xf32>
      %c0_45 = arith.constant 0 : index
      %c0_46 = arith.constant 0 : index
      %c0_47 = arith.constant 0 : index
      %64 = vector.load %arg6[%c0_45, %c0_46, %c0_47] : memref<1x8x128xf32, #tpu.memory_space<vmem>>, vector<1x8x128xf32>
      %65 = vector.shape_cast %64 : vector<1x8x128xf32> to vector<8x128xf32>
      %66 = vector.shape_cast %63 : vector<8x128xf32> to vector<1x8x128xf32>
      tpu.vector_store %arg6[%c0_45, %c0_46, %c0_47], %66 {strides = array<i32>} : memref<1x8x128xf32, #tpu.memory_space<vmem>>, vector<1x8x128xf32>,
      %cst_48 = arith.constant 0.000000e+00 : f32
      %67 = vector.broadcast %cst_48 : f32 to vector<8x128xf32>
      %c0_49 = arith.constant 0 : index
      %c0_50 = arith.constant 0 : index
      %c0_51 = arith.constant 0 : index
      %68 = vector.load %arg7[%c0_49, %c0_50, %c0_51] : memref<1x8x128xf32, #tpu.memory_space<vmem>>, vector<1x8x128xf32>
      %69 = vector.shape_cast %68 : vector<1x8x128xf32> to vector<8x128xf32>
      %70 = vector.shape_cast %67 : vector<8x128xf32> to vector<1x8x128xf32>
      tpu.vector_store %arg7[%c0_49, %c0_50, %c0_51], %70 {strides = array<i32>} : memref<1x8x128xf32, #tpu.memory_space<vmem>>, vector<1x8x128xf32>,
    } else {
    }
    %c0 = arith.constant 0 : index
    %c0_1 = arith.constant 0 : index
    %3 = vector.load %arg2[%c0, %c0_1] : memref<8x128xf32, #tpu.memory_space<vmem>>, vector<8x128xf32>
    %c0_2 = arith.constant 0 : index
    %c0_3 = arith.constant 0 : index
    %4 = vector.load %arg3[%c0_2, %c0_3] : memref<8x128xf32, #tpu.memory_space<vmem>>, vector<8x128xf32>
    %5 = arith.subf %3, %4 : vector<8x128xf32>
    %6 = math.absf %5 : vector<8x128xf32>
    %cst = arith.constant 5.000000e-01 : f32
    %7 = vector.broadcast %cst : f32 to vector<8x128xf32>
    %8 = arith.subf %7, %6 : vector<8x128xf32>
    %9 = arith.negf %8 : vector<8x128xf32>
    %10 = math.exp %9 : vector<8x128xf32>
    %cst_4 = arith.constant 1.000000e+00 : f32
    %11 = vector.broadcast %cst_4 : f32 to vector<8x128xf32>
    %12 = arith.addf %11, %10 : vector<8x128xf32>
    %13 = arith.divf %11, %12 : vector<8x128xf32>
    %14 = math.floor %4 : vector<8x128xf32>
    %15 = arith.cmpf oeq, %4, %14 : vector<8x128xf32>
    %cst_5 = arith.constant 0.000000e+00 : f32
    %16 = vector.broadcast %cst_5 : f32 to vector<8x128xf32>
    %17 = arith.cmpf oge, %4, %16 : vector<8x128xf32>
    %18 = arith.andi %15, %17 : vector<8x128xi1>
    %cst_6 = arith.constant 1.000000e+00 : f32
    %cst_7 = arith.constant 0.000000e+00 : f32
    %19 = vector.broadcast %cst_6 : f32 to vector<8x128xf32>
    %20 = vector.broadcast %cst_7 : f32 to vector<8x128xf32>
    %21 = arith.select %18, %19, %20 : vector<8x128xi1>, vector<8x128xf32>
    %22 = arith.mulf %13, %21 : vector<8x128xf32>
    %23 = vector.shape_cast %4 : vector<8x128xf32> to vector<1x8x128xf32>
    %24 = vector.shape_cast %13 : vector<8x128xf32> to vector<1x8x128xf32>
    %25 = vector.shape_cast %21 : vector<8x128xf32> to vector<1x8x128xf32>
    %26 = vector.shape_cast %22 : vector<8x128xf32> to vector<1x8x128xf32>
    %c0_8 = arith.constant 0 : index
    %c0_9 = arith.constant 0 : index
    %c0_10 = arith.constant 0 : index
    %27 = vector.load %arg4[%c0_8, %c0_9, %c0_10] : memref<1x8x128xf32, #tpu.memory_space<vmem>>, vector<1x8x128xf32>
    %28 = vector.shape_cast %27 : vector<1x8x128xf32> to vector<8x128xf32>
    %cst_11 = arith.constant dense<0xFF800000> : vector<8x128xf32>
    %29 = vector.multi_reduction <maximumf>, %23, %cst_11 [0] : vector<1x8x128xf32> to vector<8x128xf32>
    %30 = arith.maximumf %28, %29 : vector<8x128xf32>
    %c0_12 = arith.constant 0 : index
    %c0_13 = arith.constant 0 : index
    %c0_14 = arith.constant 0 : index
    %31 = vector.load %arg4[%c0_12, %c0_13, %c0_14] : memref<1x8x128xf32, #tpu.memory_space<vmem>>, vector<1x8x128xf32>
    %32 = vector.shape_cast %31 : vector<1x8x128xf32> to vector<8x128xf32>
    %33 = vector.shape_cast %30 : vector<8x128xf32> to vector<1x8x128xf32>
    tpu.vector_store %arg4[%c0_12, %c0_13, %c0_14], %33 {strides = array<i32>} : memref<1x8x128xf32, #tpu.memory_space<vmem>>, vector<1x8x128xf32>,
    %c0_15 = arith.constant 0 : index
    %c0_16 = arith.constant 0 : index
    %c0_17 = arith.constant 0 : index
    %34 = vector.load %arg5[%c0_15, %c0_16, %c0_17] : memref<1x8x128xf32, #tpu.memory_space<vmem>>, vector<1x8x128xf32>
    %35 = vector.shape_cast %34 : vector<1x8x128xf32> to vector<8x128xf32>
    %cst_18 = arith.constant dense<0.000000e+00> : vector<8x128xf32>
    %36 = vector.multi_reduction <add>, %24, %cst_18 [0] : vector<1x8x128xf32> to vector<8x128xf32>
    %37 = arith.addf %35, %36 : vector<8x128xf32>
    %c0_19 = arith.constant 0 : index
    %c0_20 = arith.constant 0 : index
    %c0_21 = arith.constant 0 : index
    %38 = vector.load %arg5[%c0_19, %c0_20, %c0_21] : memref<1x8x128xf32, #tpu.memory_space<vmem>>, vector<1x8x128xf32>
    %39 = vector.shape_cast %38 : vector<1x8x128xf32> to vector<8x128xf32>
    %40 = vector.shape_cast %37 : vector<8x128xf32> to vector<1x8x128xf32>
    tpu.vector_store %arg5[%c0_19, %c0_20, %c0_21], %40 {strides = array<i32>} : memref<1x8x128xf32, #tpu.memory_space<vmem>>, vector<1x8x128xf32>,
    %c0_22 = arith.constant 0 : index
    %c0_23 = arith.constant 0 : index
    %c0_24 = arith.constant 0 : index
    %41 = vector.load %arg6[%c0_22, %c0_23, %c0_24] : memref<1x8x128xf32, #tpu.memory_space<vmem>>, vector<1x8x128xf32>
    %42 = vector.shape_cast %41 : vector<1x8x128xf32> to vector<8x128xf32>
    %cst_25 = arith.constant dense<0.000000e+00> : vector<8x128xf32>
    %43 = vector.multi_reduction <add>, %25, %cst_25 [0] : vector<1x8x128xf32> to vector<8x128xf32>
    %44 = arith.addf %42, %43 : vector<8x128xf32>
    %c0_26 = arith.constant 0 : index
    %c0_27 = arith.constant 0 : index
    %c0_28 = arith.constant 0 : index
    %45 = vector.load %arg6[%c0_26, %c0_27, %c0_28] : memref<1x8x128xf32, #tpu.memory_space<vmem>>, vector<1x8x128xf32>
    %46 = vector.shape_cast %45 : vector<1x8x128xf32> to vector<8x128xf32>
    %47 = vector.shape_cast %44 : vector<8x128xf32> to vector<1x8x128xf32>
    tpu.vector_store %arg6[%c0_26, %c0_27, %c0_28], %47 {strides = array<i32>} : memref<1x8x128xf32, #tpu.memory_space<vmem>>, vector<1x8x128xf32>,
    %c0_29 = arith.constant 0 : index
    %c0_30 = arith.constant 0 : index
    %c0_31 = arith.constant 0 : index
    %48 = vector.load %arg7[%c0_29, %c0_30, %c0_31] : memref<1x8x128xf32, #tpu.memory_space<vmem>>, vector<1x8x128xf32>
    %49 = vector.shape_cast %48 : vector<1x8x128xf32> to vector<8x128xf32>
    %cst_32 = arith.constant dense<0.000000e+00> : vector<8x128xf32>
    %50 = vector.multi_reduction <add>, %26, %cst_32 [0] : vector<1x8x128xf32> to vector<8x128xf32>
    %51 = arith.addf %49, %50 : vector<8x128xf32>
    %c0_33 = arith.constant 0 : index
    %c0_34 = arith.constant 0 : index
    %c0_35 = arith.constant 0 : index
    %52 = vector.load %arg7[%c0_33, %c0_34, %c0_35] : memref<1x8x128xf32, #tpu.memory_space<vmem>>, vector<1x8x128xf32>
    %53 = vector.shape_cast %52 : vector<1x8x128xf32> to vector<8x128xf32>
    %54 = vector.shape_cast %51 : vector<8x128xf32> to vector<1x8x128xf32>
    tpu.vector_store %arg7[%c0_33, %c0_34, %c0_35], %54 {strides = array<i32>} : memref<1x8x128xf32, #tpu.memory_space<vmem>>, vector<1x8x128xf32>,
    return
  }
  func.func @transform_0(%arg0: i32, %arg1: i32) -> (i32, i32) {
    %c1_i32 = arith.constant 1 : i32
    %0 = arith.muli %arg0, %c1_i32 : i32
    %1 = arith.addi %0, %arg1 : i32
    %c0_i32 = arith.constant 0 : i32
    %c0_i32_0 = arith.constant 0 : i32
    return %1, %c0_i32 : i32, i32
  }
  func.func @transform_1(%arg0: i32, %arg1: i32) -> (i32, i32) {
    %c1_i32 = arith.constant 1 : i32
    %0 = arith.muli %arg0, %c1_i32 : i32
    %1 = arith.addi %0, %arg1 : i32
    %c0_i32 = arith.constant 0 : i32
    %c0_i32_0 = arith.constant 0 : i32
    return %1, %c0_i32 : i32, i32
  }
  func.func @transform_2(%arg0: i32, %arg1: i32) -> (i32, i32, i32) {
    %c0_i32 = arith.constant 0 : i32
    %c0_i32_0 = arith.constant 0 : i32
    %c0_i32_1 = arith.constant 0 : i32
    return %arg0, %c0_i32, %c0_i32_0 : i32, i32, i32
  }
  func.func @transform_3(%arg0: i32, %arg1: i32) -> (i32, i32, i32) {
    %c0_i32 = arith.constant 0 : i32
    %c0_i32_0 = arith.constant 0 : i32
    %c0_i32_1 = arith.constant 0 : i32
    return %arg0, %c0_i32, %c0_i32_0 : i32, i32, i32
  }
  func.func @transform_4(%arg0: i32, %arg1: i32) -> (i32, i32, i32) {
    %c0_i32 = arith.constant 0 : i32
    %c0_i32_0 = arith.constant 0 : i32
    %c0_i32_1 = arith.constant 0 : i32
    return %arg0, %c0_i32, %c0_i32_0 : i32, i32, i32
  }
  func.func @transform_5(%arg0: i32, %arg1: i32) -> (i32, i32, i32) {
    %c0_i32 = arith.constant 0 : i32
    %c0_i32_0 = arith.constant 0 : i32
    %c0_i32_1 = arith.constant 0 : i32
    return %arg0, %c0_i32, %c0_i32_0 : i32, i32, i32
  }
}

</mosaic_0001>

<llo_original>
// kernel: tpu_custom_call.1
$region0: #{tpu_custom_call.1}
  #allocation0 [shape = 'u32[]', space=smem, size = 0x4, offset = 0x4, fixed_abs, tag = 'smem constant byte address 0x4 - core index']
  #allocation1 [shape = 'u32[144,128]{1,0:T(1,128)}', space=vmem, size = 0x12000, scoped, tag = 'internal scratch']
  %s0 = inlined_call_operand.hbm [shape: f32[16,128], index: 0, kind: input, shape index: {}]
  %s1 = inlined_call_operand.hbm [shape: f32[16,128], index: 1, kind: input, shape index: {}]
  %s2 = inlined_call_operand.hbm [shape: f32[2,8,128], index: 2, kind: output, shape index: {0}]
  %s3 = inlined_call_operand.hbm [shape: f32[2,8,128], index: 3, kind: output, shape index: {1}]
  %s4 = inlined_call_operand.hbm [shape: f32[2,8,128], index: 4, kind: output, shape index: {2}]
  %s5 = inlined_call_operand.hbm [shape: f32[2,8,128], index: 5, kind: output, shape index: {3}]
  %6 = xla_tuple %s2, %s3, %s4, %s5
  %s7 = sld [smem:[#allocation0]]
  $region77: #{tpu_custom_call.1} parent=0
    _
  %s9 = ssub.s32 1, %s7
  %s10 = scalar_select 0, %s9, %s7
  $region1: #{tpu_custom_call.1} parent=0
    #allocation2 [shape = 'u8[8192]{0}', space=vmem, size = 0x2000, scoped, tag = 'input window, operand 0']
    #allocation3 [shape = 's32[2]{0}', space=sflag, size = 0x8, scoped, tag = 'scoped memory for tpu_custom_call.1']
    #allocation4 [shape = 's32[2]{0}', space=sflag, size = 0x8, scoped, tag = 'scoped memory for tpu_custom_call.1']
    #allocation5 [shape = 'u8[8192]{0}', space=vmem, size = 0x2000, scoped, tag = 'input window, operand 1']
    #allocation6 [shape = 's32[2]{0}', space=sflag, size = 0x8, scoped, tag = 'scoped memory for tpu_custom_call.1']
    #allocation7 [shape = 'u8[8192]{0}', space=vmem, size = 0x2000, scoped, tag = 'output window, operand 0']
    #allocation8 [shape = 'u8[8192]{0}', space=vmem, size = 0x2000, scoped, tag = 'output window, operand 1']
    #allocation9 [shape = 's32[2]{0}', space=sflag, size = 0x8, scoped, tag = 'scoped memory for tpu_custom_call.1']
    #allocation10 [shape = 'u8[8192]{0}', space=vmem, size = 0x2000, scoped, tag = 'output window, operand 2']
    #allocation11 [shape = 'u8[8192]{0}', space=vmem, size = 0x2000, scoped, tag = 'output window, operand 3']
    #allocation12 [shape = 's32[2]{0}', space=sflag, size = 0x8, scoped, tag = 'scoped memory for tpu_custom_call.1']
    %11 = vsyncpa [#allocation3], 0
    %s12 = scalar_lea.sflag [#allocation3], 1
    %13 = vsyncpa %s12, 0
    %14 = vsyncpa [#allocation6], 0
    %s15 = scalar_lea.sflag [#allocation6], 1
    %16 = vsyncpa %s15, 0
    %17 = vsyncpa [#allocation4], 0
    %s18 = scalar_lea.sflag [#allocation4], 1
    %19 = vsyncpa %s18, 0
    %20 = vsyncpa [#allocation9], 0
    %s21 = scalar_lea.sflag [#allocation9], 1
    %22 = vsyncpa %s21, 0
    %23 = vsyncpa [#allocation12], 0
    %s24 = scalar_lea.sflag [#allocation12], 1
    %25 = vsyncpa %s24, 0
    loop: start=0, step=1, limit=4
    $region2: #{tpu_custom_call.1} parent=1 // loop_pre_header
      _
    $region3: #{tpu_custom_call.1} parent=1 // loop_header
      %s27 = sphi 0, %s31
      %p28 = scmp.ge.s32.totalorder %s27, 4
      %s34 = sphi 0, %s46
      %s35 = sphi 0, %s42
      %s36 = sphi 0, %s34
      %s37 = sphi 0, %s35
      %s38 = sphi 0, %s36
      %s39 = sphi 0, %s37
      %s51 = sphi 0, %s53
      %s54 = sphi 0, %s51
      %s55 = sphi 0, %s54
      %s71 = sphi 0, %s55
      %s79 = sphi 0, %s81
      %s82 = sphi 0, %s79
      %s83 = sphi 0, %s82
      %s99 = sphi 0, %s83
      %s105 = sphi 0, %s107
      %s108 = sphi 0, %s105
      %s109 = sphi 0, %s108
      %s125 = sphi 0, %s109
      %s131 = sphi 0, %s133
      %s134 = sphi 0, %s131
      %s135 = sphi 0, %s134
      %s151 = sphi 0, %s135
      %s157 = sphi 0, %s159
      %s160 = sphi 0, %s157
      %s161 = sphi 0, %s160
      %s177 = sphi 0, %s161
      %s183 = sphi 0, %s185
      %s186 = sphi 0, %s183
      %s187 = sphi 0, %s186
      %s203 = sphi 0, %s187
    $region4: #{tpu_custom_call.1} parent=1 // loop_header_branch
      %30 = sbr.rel (%p28) target = $region8
    $region5: #{tpu_custom_call.1} parent=1 // loop_body
      %s32 = ssub.s32 %s27, 1
      %s33 = ssub.s32 %s27, 2
      %s40 = sadd.s32 1, %s35
      %p41 = scmp.ge.s32.totalorder %s40, 1
      %s42 = scalar_select %p41, 0, %s40
      %s43 = sadd.s32 1, %s34
      %s44 = scalar_select %p41, %s43, %s34
      %p45 = scmp.ge.s32.totalorder %s44, 2
      %s46 = scalar_select %p45, 0, %s44
      %s47 = sadd.s32 %s34, %s35
      %s48 = sadd.s32 %s46, %s42
      %s49 = ssub.s32 %s47, %s48
      %p50 = scmp.eq.s32.totalorder %s49, 0
      %s52 = sadd.s32 %s51, 1
      %s53 = scalar_select %p50, %s51, %s52
      %p56 = pneg %p50
      %p57 = scmp.eq.s32.totalorder %s27, 1
      %p58 = por %p56, %p57
      %p59 = scmp.ne.s32.totalorder %s51, %s54
      %p60 = scmp.eq.s32.totalorder %s27, 0
      %p61 = por %p59, %p60
      %p62 = scmp.ne.s32.totalorder %s51, %s54
      %p63 = scmp.eq.s32.totalorder %s32, 1
      %p64 = por %p62, %p63
      %p65 = scmp.ne.s32.totalorder %s54, %s55
      %p66 = scmp.eq.s32.totalorder %s32, 0
      %p67 = por %p65, %p66
      %p68 = scmp.ne.s32.totalorder %s54, %s55
      %p69 = scmp.eq.s32.totalorder %s33, 1
      %p70 = por %p68, %p69
      %p72 = scmp.ne.s32.totalorder %s55, %s71
      %p73 = scmp.eq.s32.totalorder %s33, 0
      %p74 = por %p72, %p73
      %s75 = sadd.s32 %s34, %s35
      %s76 = sadd.s32 %s46, %s42
      %s77 = ssub.s32 %s75, %s76
      %p78 = scmp.eq.s32.totalorder %s77, 0
      %s80 = sadd.s32 %s79, 1
      %s81 = scalar_select %p78, %s79, %s80
      %p84 = pneg %p78
      %p85 = scmp.eq.s32.totalorder %s27, 1
      %p86 = por %p84, %p85
      %p87 = scmp.ne.s32.totalorder %s79, %s82
      %p88 = scmp.eq.s32.totalorder %s27, 0
      %p89 = por %p87, %p88
      %p90 = scmp.ne.s32.totalorder %s79, %s82
      %p91 = scmp.eq.s32.totalorder %s32, 1
      %p92 = por %p90, %p91
      %p93 = scmp.ne.s32.totalorder %s82, %s83
      %p94 = scmp.eq.s32.totalorder %s32, 0
      %p95 = por %p93, %p94
      %p96 = scmp.ne.s32.totalorder %s82, %s83
      %p97 = scmp.eq.s32.totalorder %s33, 1
      %p98 = por %p96, %p97
      %p100 = scmp.ne.s32.totalorder %s83, %s99
      %p101 = scmp.eq.s32.totalorder %s33, 0
      %p102 = por %p100, %p101
      %s103 = ssub.s32 %s34, %s46
      %p104 = scmp.eq.s32.totalorder %s103, 0
      %s106 = sadd.s32 %s105, 1
      %s107 = scalar_select %p104, %s105, %s106
      %p110 = pneg %p104
      %p111 = scmp.eq.s32.totalorder %s27, 1
      %p112 = por %p110, %p111
      %p113 = scmp.ne.s32.totalorder %s105, %s108
      %p114 = scmp.eq.s32.totalorder %s27, 0
      %p115 = por %p113, %p114
      %p116 = scmp.ne.s32.totalorder %s105, %s108
      %p117 = scmp.eq.s32.totalorder %s32, 1
      %p118 = por %p116, %p117
      %p119 = scmp.ne.s32.totalorder %s108, %s109
      %p120 = scmp.eq.s32.totalorder %s32, 0
      %p121 = por %p119, %p120
      %p122 = scmp.ne.s32.totalorder %s108, %s109
      %p123 = scmp.eq.s32.totalorder %s33, 1
      %p124 = por %p122, %p123
      %p126 = scmp.ne.s32.totalorder %s109, %s125
      %p127 = scmp.eq.s32.totalorder %s33, 0
      %p128 = por %p126, %p127
      %s129 = ssub.s32 %s34, %s46
      %p130 = scmp.eq.s32.totalorder %s129, 0
      %s132 = sadd.s32 %s131, 1
      %s133 = scalar_select %p130, %s131, %s132
      %p136 = pneg %p130
      %p137 = scmp.eq.s32.totalorder %s27, 1
      %p138 = por %p136, %p137
      %p139 = scmp.ne.s32.totalorder %s131, %s134
      %p140 = scmp.eq.s32.totalorder %s27, 0
      %p141 = por %p139, %p140
      %p142 = scmp.ne.s32.totalorder %s131, %s134
      %p143 = scmp.eq.s32.totalorder %s32, 1
      %p144 = por %p142, %p143
      %p145 = scmp.ne.s32.totalorder %s134, %s135
      %p146 = scmp.eq.s32.totalorder %s32, 0
      %p147 = por %p145, %p146
      %p148 = scmp.ne.s32.totalorder %s134, %s135
      %p149 = scmp.eq.s32.totalorder %s33, 1
      %p150 = por %p148, %p149
      %p152 = scmp.ne.s32.totalorder %s135, %s151
      %p153 = scmp.eq.s32.totalorder %s33, 0
      %p154 = por %p152, %p153
      %s155 = ssub.s32 %s34, %s46
      %p156 = scmp.eq.s32.totalorder %s155, 0
      %s158 = sadd.s32 %s157, 1
      %s159 = scalar_select %p156, %s157, %s158
      %p162 = pneg %p156
      %p163 = scmp.eq.s32.totalorder %s27, 1
      %p164 = por %p162, %p163
      %p165 = scmp.ne.s32.totalorder %s157, %s160
      %p166 = scmp.eq.s32.totalorder %s27, 0
      %p167 = por %p165, %p166
      %p168 = scmp.ne.s32.totalorder %s157, %s160
      %p169 = scmp.eq.s32.totalorder %s32, 1
      %p170 = por %p168, %p169
      %p171 = scmp.ne.s32.totalorder %s160, %s161
      %p172 = scmp.eq.s32.totalorder %s32, 0
      %p173 = por %p171, %p172
      %p174 = scmp.ne.s32.totalorder %s160, %s161
      %p175 = scmp.eq.s32.totalorder %s33, 1
      %p176 = por %p174, %p175
      %p178 = scmp.ne.s32.totalorder %s161, %s177
      %p179 = scmp.eq.s32.totalorder %s33, 0
      %p180 = por %p178, %p179
      %s181 = ssub.s32 %s34, %s46
      %p182 = scmp.eq.s32.totalorder %s181, 0
      %s184 = sadd.s32 %s183, 1
      %s185 = scalar_select %p182, %s183, %s184
      %p188 = pneg %p182
      %p189 = scmp.eq.s32.totalorder %s27, 1
      %p190 = por %p188, %p189
      %p191 = scmp.ne.s32.totalorder %s183, %s186
      %p192 = scmp.eq.s32.totalorder %s27, 0
      %p193 = por %p191, %p192
      %p194 = scmp.ne.s32.totalorder %s183, %s186
      %p195 = scmp.eq.s32.totalorder %s32, 1
      %p196 = por %p194, %p195
      %p197 = scmp.ne.s32.totalorder %s186, %s187
      %p198 = scmp.eq.s32.totalorder %s32, 0
      %p199 = por %p197, %p198
      %p200 = scmp.ne.s32.totalorder %s186, %s187
      %p201 = scmp.eq.s32.totalorder %s33, 1
      %p202 = por %p200, %p201
      %p204 = scmp.ne.s32.totalorder %s187, %s203
      %p205 = scmp.eq.s32.totalorder %s33, 0
      %p206 = por %p204, %p205
      %p207 = scmp.le.s32.totalorder 1, %s27
      %p208 = scmp.lt.s32.totalorder %s27, 3
      %p209 = pnand %p207, %p208
      %p210 = pneg %p209
      // Predicated region
      $region9: #{tpu_custom_call.1} parent=5 // pred_check
        _
      $region10: #{tpu_custom_call.1} parent=5 // pred_check_branch
        %212 = sbr.rel (%p209) target = $region12
      $region11: #{tpu_custom_call.1} parent=5 // pred_region
        %s213 = ssub.s32 %s27, 1
      $region12: #{tpu_custom_call.1} parent=5 // pred_fallthru
        _
      %p214 = scmp.lt.s32.totalorder %s27, 2
      // Predicated region
      $region13: #{tpu_custom_call.1} parent=5 // pred_check
        %p215 = pneg %p214
      $region14: #{tpu_custom_call.1} parent=5 // pred_check_branch
        %217 = sbr.rel (%p215) target = $region16
      $region15: #{tpu_custom_call.1} parent=5 // pred_region
        // Predicated region
        $region17: #{tpu_custom_call.1} parent=15 // pred_check
          %p218 = pneg %p61
        $region18: #{tpu_custom_call.1} parent=15 // pred_check_branch
          %220 = sbr.rel (%p218) target = $region20
        $region19: #{tpu_custom_call.1} parent=15 // pred_region
          %s221 = sand.u32 %s51, 1
          %s222 = scalar_lea.sflag [#allocation3], %s221
          %s223 = sand.u32 %s51, 1
          %s224 = smul.addr %s223, 8
          %s225 = scalar_lea.vmem [#allocation2], %s224
          %s226 = sadd.s32 %s34, %s35
          %s228 = ssub.s32 128, 128
          %229 = vsyncadd %s222, %s228
          %s230 = smul.addr %s226, 128
          %s231 = scalar_lea.hbm %s0, %s230
          %s233 = sshll.u32 %s225, 4
          %s234 = int_to_ptr.vmem [resolvable:$true] %s233
          %236 = dma.hbm_to_vmem [thread:$0]  %s231, 128, %s234, %s222
        $region20: #{tpu_custom_call.1} parent=15 // pred_fallthru
          _
        // Predicated region
        $region21: #{tpu_custom_call.1} parent=15 // pred_check
          %p237 = pneg %p89
        $region22: #{tpu_custom_call.1} parent=15 // pred_check_branch
          %239 = sbr.rel (%p237) target = $region24
        $region23: #{tpu_custom_call.1} parent=15 // pred_region
          %s240 = sand.u32 %s79, 1
          %s241 = scalar_lea.sflag [#allocation6], %s240
          %s242 = sand.u32 %s79, 1
          %s243 = smul.addr %s242, 8
          %s244 = scalar_lea.vmem [#allocation5], %s243
          %s245 = sadd.s32 %s34, %s35
          %s247 = ssub.s32 128, 128
          %248 = vsyncadd %s241, %s247
          %s249 = smul.addr %s245, 128
          %s250 = scalar_lea.hbm %s1, %s249
          %s252 = sshll.u32 %s244, 4
          %s253 = int_to_ptr.vmem [resolvable:$true] %s252
          %255 = dma.hbm_to_vmem [thread:$0]  %s250, 128, %s253, %s241
        $region24: #{tpu_custom_call.1} parent=15 // pred_fallthru
          _
      $region16: #{tpu_custom_call.1} parent=5 // pred_fallthru
        _
      %p256 = scmp.le.s32.totalorder 1, %s27
      %p257 = scmp.lt.s32.totalorder %s27, 3
      %p258 = pnand %p256, %p257
      %p259 = pneg %p258
      // Predicated region
      $region25: #{tpu_custom_call.1} parent=5 // pred_check
        _
      $region26: #{tpu_custom_call.1} parent=5 // pred_check_branch
        %261 = sbr.rel (%p258) target = $region28
      $region27: #{tpu_custom_call.1} parent=5 // pred_region
        %s262 = ssub.s32 %s27, 1
        %s263 = sand.u32 %s54, 1
        %s264 = scalar_lea.sflag [#allocation3], %s263
        %s265 = sand.u32 %s54, 1
        %s266 = smul.addr %s265, 8
        %s267 = scalar_lea.vmem [#allocation2], %s266
        // Predicated region
        $region29: #{tpu_custom_call.1} parent=27 // pred_check
          %p268 = pneg %p67
        $region30: #{tpu_custom_call.1} parent=27 // pred_check_branch
          %270 = sbr.rel (%p268) target = $region32
        $region31: #{tpu_custom_call.1} parent=27 // pred_region
          %271 = dma.done %s264, 128
        $region32: #{tpu_custom_call.1} parent=27 // pred_fallthru
          _
        %s272 = sand.u32 %s82, 1
        %s273 = scalar_lea.sflag [#allocation6], %s272
        %s274 = sand.u32 %s82, 1
        %s275 = smul.addr %s274, 8
        %s276 = scalar_lea.vmem [#allocation5], %s275
        // Predicated region
        $region33: #{tpu_custom_call.1} parent=27 // pred_check
          %p277 = pneg %p95
        $region34: #{tpu_custom_call.1} parent=27 // pred_check_branch
          %279 = sbr.rel (%p277) target = $region36
        $region35: #{tpu_custom_call.1} parent=27 // pred_region
          %280 = dma.done %s273, 128
        $region36: #{tpu_custom_call.1} parent=27 // pred_fallthru
          _
        %s281 = sand.u32 %s54, 1
        %s282 = scalar_lea.sflag [#allocation3], %s281
        %s283 = sand.u32 %s54, 1
        %s284 = smul.addr %s283, 8
        %s285 = scalar_lea.vmem [#allocation2], %s284
        %p286 = pneg %p67
        %p287 = pneg %p64
        %s288 = sand.u32 %s82, 1
        %s289 = scalar_lea.sflag [#allocation6], %s288
        %s290 = sand.u32 %s82, 1
        %s291 = smul.addr %s290, 8
        %s292 = scalar_lea.vmem [#allocation5], %s291
        %p293 = pneg %p95
        %p294 = pneg %p92
        %p295 = pneg %p121
        %p296 = pneg %p118
        %s297 = sand.u32 %s108, 1
        %s298 = scalar_lea.sflag [#allocation4], %s297
        %s299 = sand.u32 %s108, 1
        %s300 = smul.addr %s299, 8
        %s301 = scalar_lea.vmem [#allocation7], %s300
        %p302 = pneg %p147
        %p303 = pneg %p144
        %s304 = sand.u32 %s32, 1
        %s305 = scalar_lea.sflag [#allocation9], %s304
        %s306 = sand.u32 %s134, 1
        %s307 = smul.addr %s306, 8
        %s308 = scalar_lea.vmem [#allocation8], %s307
        %p309 = pneg %p173
        %p310 = pneg %p170
        %s311 = sand.u32 %s32, 1
        %s312 = scalar_lea.sflag [#allocation9], %s311
        %s313 = sand.u32 %s160, 1
        %s314 = smul.addr %s313, 8
        %s315 = scalar_lea.vmem [#allocation10], %s314
        %p316 = pneg %p199
        %p317 = pneg %p196
        %s318 = sand.u32 %s186, 1
        %s319 = scalar_lea.sflag [#allocation12], %s318
        %s320 = sand.u32 %s186, 1
        %s321 = smul.addr %s320, 8
        %s322 = scalar_lea.vmem [#allocation11], %s321
        %s323 = sadd.s32 %s36, %s37
        %s324 = sadd.s32 %s36, %s37
        %p325 = scmp.eq.s32.totalorder %s37, 0
        // Predicated region
        $region37: #{tpu_custom_call.1} parent=27 // pred_check
          %p326 = pneg %p325
        $region38: #{tpu_custom_call.1} parent=27 // pred_check_branch
          %328 = sbr.rel (%p326) target = $region40
        $region39: #{tpu_custom_call.1} parent=27 // pred_region
          %329 = vst [vmem:[%s301] sm:$0xff] -inf
          %330 = vst [vmem:[%s308] sm:$0xff] 0.0
          %331 = vst [vmem:[%s315] sm:$0xff] 0.0
          %332 = vst [vmem:[%s322] sm:$0xff] 0.0
        $region40: #{tpu_custom_call.1} parent=27 // pred_fallthru
          _
        %v333 = vld [vmem:[%s267] sm:$0xff]
        %v334 = vld [vmem:[%s276] sm:$0xff]
        %v335 = vsub.f32 %v333, %v334
        %v336 = vand.u32 2147483647, %v335
        %v337 = vsub.f32 0.5, %v336
        %v338 = vxor.u32 %v337, 2147483648
        %v339 = vmul.f32 %v338, 1.442695
        %v340 = vpow.pop %v339
        %v341 = vadd.f32 %v340, 1.0
        %v342 = vrcp.pop %v341
        %v343 = vmul.f32 1.0, %v342
        %v344 = vfloor.f32 %v334
        %vm345 = vcmp.eq.f32.partialorder %v334, %v344
        %vm346 = vcmp.ge.f32.partialorder %v334, 0.0
        %vm347 = vmand %vm345, %vm346
        %v348 = vsel %vm347, 1.0, 0.0
        %v349 = vmul.f32 %v343, %v348
        %v350 = vld [vmem:[%s301] sm:$0xff]
        %v351 = vmax.f32 %v350, %v334
        %352 = vst [vmem:[%s301] sm:$0xff] %v351
        %v353 = vld [vmem:[%s308] sm:$0xff]
        %v354 = vadd.f32 %v343, 0.0
        %v355 = vadd.f32 %v353, %v354
        %356 = vst [vmem:[%s308] sm:$0xff] %v355
        %v357 = vld [vmem:[%s315] sm:$0xff]
        %v358 = vadd.f32 %v348, 0.0
        %v359 = vadd.f32 %v357, %v358
        %360 = vst [vmem:[%s315] sm:$0xff] %v359
        %v361 = vld [vmem:[%s322] sm:$0xff]
        %v362 = vadd.f32 %v349, 0.0
        %v363 = vadd.f32 %v361, %v362
        %364 = vst [vmem:[%s322] sm:$0xff] %v363
        %s365 = sand.u32 %s108, 1
        %s366 = scalar_lea.sflag [#allocation4], %s365
        %s367 = sand.u32 %s108, 1
        %s368 = smul.addr %s367, 8
        %s369 = scalar_lea.vmem [#allocation7], %s368
        %s370 = sand.u32 %s32, 1
        %s371 = scalar_lea.sflag [#allocation9], %s370
        %s372 = sand.u32 %s134, 1
        %s373 = smul.addr %s372, 8
        %s374 = scalar_lea.vmem [#allocation8], %s373
        %s375 = sand.u32 %s32, 1
        %s376 = scalar_lea.sflag [#allocation9], %s375
        %s377 = sand.u32 %s160, 1
        %s378 = smul.addr %s377, 8
        %s379 = scalar_lea.vmem [#allocation10], %s378
        %s380 = sand.u32 %s186, 1
        %s381 = scalar_lea.sflag [#allocation12], %s380
        %s382 = sand.u32 %s186, 1
        %s383 = smul.addr %s382, 8
        %s384 = scalar_lea.vmem [#allocation11], %s383
        // Predicated region
        $region41: #{tpu_custom_call.1} parent=27 // pred_check
          %p385 = pneg %p118
        $region42: #{tpu_custom_call.1} parent=27 // pred_check_branch
          %387 = sbr.rel (%p385) target = $region44
        $region43: #{tpu_custom_call.1} parent=27 // pred_region
          %s389 = ssub.s32 128, 128
          %390 = vsyncadd %s366, %s389
          %s391 = smul.addr %s36, 128
          %s392 = scalar_lea.hbm %s2, %s391
          %s394 = sshll.u32 %s369, 4
          %s395 = int_to_ptr.vmem [resolvable:$true] %s394
          %397 = dma.vmem_to_hbm [thread:$0]  %s395, 128, %s392, %s366
        $region44: #{tpu_custom_call.1} parent=27 // pred_fallthru
          _
        // Predicated region
        $region45: #{tpu_custom_call.1} parent=27 // pred_check
          %p398 = pneg %p144
        $region46: #{tpu_custom_call.1} parent=27 // pred_check_branch
          %400 = sbr.rel (%p398) target = $region48
        $region47: #{tpu_custom_call.1} parent=27 // pred_region
          %s402 = ssub.s32 128, 128
          %403 = vsyncadd %s371, %s402
          %s404 = smul.addr %s36, 128
          %s405 = scalar_lea.hbm %s3, %s404
          %s407 = sshll.u32 %s374, 4
          %s408 = int_to_ptr.vmem [resolvable:$true] %s407
          %410 = dma.vmem_to_hbm [thread:$0]  %s408, 128, %s405, %s371
        $region48: #{tpu_custom_call.1} parent=27 // pred_fallthru
          _
        // Predicated region
        $region49: #{tpu_custom_call.1} parent=27 // pred_check
          %p411 = pneg %p170
        $region50: #{tpu_custom_call.1} parent=27 // pred_check_branch
          %413 = sbr.rel (%p411) target = $region52
        $region51: #{tpu_custom_call.1} parent=27 // pred_region
          %s415 = ssub.s32 128, 128
          %416 = vsyncadd %s376, %s415
          %s417 = smul.addr %s36, 128
          %s418 = scalar_lea.hbm %s4, %s417
          %s420 = sshll.u32 %s379, 4
          %s421 = int_to_ptr.vmem [resolvable:$true] %s420
          %423 = dma.vmem_to_hbm [thread:$0]  %s421, 128, %s418, %s376
        $region52: #{tpu_custom_call.1} parent=27 // pred_fallthru
          _
        // Predicated region
        $region53: #{tpu_custom_call.1} parent=27 // pred_check
          %p424 = pneg %p196
        $region54: #{tpu_custom_call.1} parent=27 // pred_check_branch
          %426 = sbr.rel (%p424) target = $region56
        $region55: #{tpu_custom_call.1} parent=27 // pred_region
          %s428 = ssub.s32 128, 128
          %429 = vsyncadd %s381, %s428
          %s430 = smul.addr %s36, 128
          %s431 = scalar_lea.hbm %s5, %s430
          %s433 = sshll.u32 %s384, 4
          %s434 = int_to_ptr.vmem [resolvable:$true] %s433
          %436 = dma.vmem_to_hbm [thread:$0]  %s434, 128, %s431, %s381
        $region56: #{tpu_custom_call.1} parent=27 // pred_fallthru
          _
      $region28: #{tpu_custom_call.1} parent=5 // pred_fallthru
        _
      %p437 = scmp.le.s32.totalorder 2, %s27
      // Predicated region
      $region57: #{tpu_custom_call.1} parent=5 // pred_check
        %p438 = pneg %p437
      $region58: #{tpu_custom_call.1} parent=5 // pred_check_branch
        %440 = sbr.rel (%p438) target = $region60
      $region59: #{tpu_custom_call.1} parent=5 // pred_region
        %s441 = ssub.s32 %s27, 2
        // Predicated region
        $region61: #{tpu_custom_call.1} parent=59 // pred_check
          %p442 = pneg %p124
        $region62: #{tpu_custom_call.1} parent=59 // pred_check_branch
          %444 = sbr.rel (%p442) target = $region64
        $region63: #{tpu_custom_call.1} parent=59 // pred_region
          %s445 = sand.u32 %s109, 1
          %s446 = scalar_lea.sflag [#allocation4], %s445
          %s447 = sand.u32 %s109, 1
          %s448 = smul.addr %s447, 8
          %s449 = scalar_lea.vmem [#allocation7], %s448
          %450 = dma.done %s446, 128
        $region64: #{tpu_custom_call.1} parent=59 // pred_fallthru
          _
        // Predicated region
        $region65: #{tpu_custom_call.1} parent=59 // pred_check
          %p451 = pneg %p150
        $region66: #{tpu_custom_call.1} parent=59 // pred_check_branch
          %453 = sbr.rel (%p451) target = $region68
        $region67: #{tpu_custom_call.1} parent=59 // pred_region
          %s454 = sand.u32 %s33, 1
          %s455 = scalar_lea.sflag [#allocation9], %s454
          %s456 = sand.u32 %s135, 1
          %s457 = smul.addr %s456, 8
          %s458 = scalar_lea.vmem [#allocation8], %s457
          %459 = dma.done %s455, 128
        $region68: #{tpu_custom_call.1} parent=59 // pred_fallthru
          _
        // Predicated region
        $region69: #{tpu_custom_call.1} parent=59 // pred_check
          %p460 = pneg %p176
        $region70: #{tpu_custom_call.1} parent=59 // pred_check_branch
          %462 = sbr.rel (%p460) target = $region72
        $region71: #{tpu_custom_call.1} parent=59 // pred_region
          %s463 = sand.u32 %s33, 1
          %s464 = scalar_lea.sflag [#allocation9], %s463
          %s465 = sand.u32 %s161, 1
          %s466 = smul.addr %s465, 8
          %s467 = scalar_lea.vmem [#allocation10], %s466
          %468 = dma.done %s464, 128
        $region72: #{tpu_custom_call.1} parent=59 // pred_fallthru
          _
        // Predicated region
        $region73: #{tpu_custom_call.1} parent=59 // pred_check
          %p469 = pneg %p202
        $region74: #{tpu_custom_call.1} parent=59 // pred_check_branch
          %471 = sbr.rel (%p469) target = $region76
        $region75: #{tpu_custom_call.1} parent=59 // pred_region
          %s472 = sand.u32 %s187, 1
          %s473 = scalar_lea.sflag [#allocation12], %s472
          %s474 = sand.u32 %s187, 1
          %s475 = smul.addr %s474, 8
          %s476 = scalar_lea.vmem [#allocation11], %s475
          %477 = dma.done %s473, 128
        $region76: #{tpu_custom_call.1} parent=59 // pred_fallthru
          _
      $region60: #{tpu_custom_call.1} parent=5 // pred_fallthru
        _
    $region6: #{tpu_custom_call.1} parent=1 // loop_footer
      %s31 = sadd.s32 1, %s27
    $region7: #{tpu_custom_call.1} parent=1 // loop_footer_branch
      %26 = sbr.rel target = $region3
    $region8: #{tpu_custom_call.1} parent=1 // loop_exit
      _
    %478 = vsyncpa [#allocation3], 1
    %s479 = scalar_lea.sflag [#allocation3], 1
    %480 = vsyncpa %s479, 1
    %481 = vsyncpa [#allocation6], 1
    %s482 = scalar_lea.sflag [#allocation6], 1
    %483 = vsyncpa %s482, 1
    %484 = vsyncpa [#allocation4], 1
    %s485 = scalar_lea.sflag [#allocation4], 1
    %486 = vsyncpa %s485, 1
    %487 = vsyncpa [#allocation9], 1
    %s488 = scalar_lea.sflag [#allocation9], 1
    %489 = vsyncpa %s488, 1
    %490 = vsyncpa [#allocation12], 1
    %s491 = scalar_lea.sflag [#allocation12], 1
    %492 = vsyncpa %s491, 1

</llo_original>
